<compile_context>
chip_gen: v7x
topology: tpu7x:2x2x1
jax: 0.10.0
libtpu: 0.0.40
codegen_flags: <defaults>
</compile_context>

<pallas_src>
import functools
import math

import jax
import jax.numpy as jnp
from jax.experimental import pallas as pl
from jax.experimental.pallas import tpu as pltpu

LANE = 128
SUBLANE = 8


def _round_up(x: int, m: int) -> int:
    return ((x + m - 1) // m) * m


def make_mlp_kernel(num_linear_layers: int, in_features: int):
    """Kernel computing an MLP with `num_linear_layers` Linear layers, ReLU
    after every layer except the last (matches WorldModel.model).

    refs = (x, w0, b0, ..., w_{L-1}, b_{L-1}, out, xpad_scratch)."""

    def kernel(*refs):
        x_ref = refs[0]
        out_ref = refs[-2]
        xpad_ref = refs[-1]

        # Lane-pad x inside VMEM: columns [in_features:in_pad] are zero, so the
        # contraction against the (zero-padded) first-layer weight is exact.
        xpad_ref[...] = jnp.zeros_like(xpad_ref)
        xpad_ref[:, :in_features] = x_ref[...]
        x = xpad_ref[...]

        for li in range(num_linear_layers):
            w = refs[1 + 2 * li][...]
            b = refs[2 + 2 * li][...]
            x = jnp.dot(x, w, preferred_element_type=jnp.float32) + b  # MXU + VPU
            if li < num_linear_layers - 1:
                x = jnp.maximum(x, 0.0)  # ReLU (VPU)
        out_ref[...] = x.astype(out_ref.dtype)

    return kernel


def init_world_model_params(key, state_dim: int, layer_num: int, hidden_units: int):
    """PyTorch-style uniform(+/- 1/sqrt(fan_in)) init.

    Returns list of (W, b) with W shape (in, out), b shape (1, out)."""
    dims = [state_dim + 1] + [hidden_units] * layer_num + [state_dim]
    params = []
    for i in range(len(dims) - 1):
        fan_in, fan_out = dims[i], dims[i + 1]
        key, kw, kb = jax.random.split(key, 3)
        bound = 1.0 / math.sqrt(fan_in)
        w = jax.random.uniform(kw, (fan_in, fan_out), jnp.float32, -bound, bound)
        b = jax.random.uniform(kb, (1, fan_out), jnp.float32, -bound, bound)
        params.append((w, b))
    return params


def prepare_world_model_params(params):
    """Pad parameters ONCE (outside the jitted forward).

    First-layer K (input features) and all hidden K/N dims are zero-padded to
    multiples of 128 (lane width).  The final output dim keeps its natural
    width so the kernel writes exactly state_dim lanes.  Zero padding is
    numerically exact (padded activation columns stay exactly zero)."""
    n_layers = len(params)
    padded = []
    for i, (w, b) in enumerate(params):
        w = jnp.asarray(w, jnp.float32)
        b = jnp.asarray(b, jnp.float32).reshape(1, -1)
        k, n = w.shape
        k_pad = _round_up(k, LANE)
        n_pad = n if i == n_layers - 1 else _round_up(n, LANE)
        w_p = jnp.zeros((k_pad, n_pad), jnp.float32).at[:k, :n].set(w)
        b_p = jnp.zeros((1, n_pad), jnp.float32).at[:, :n].set(b)
        padded.append((w_p, b_p))
    return padded


@jax.jit
def world_model_forward(s, padded_params):
    """Forward pass of WorldModel. `s` is (batch, ...) with flattened feature
    size == prod(state_shape)+1. Returns (batch, prod(state_shape))."""
    batch = s.shape[0]
    x = jnp.reshape(s, (batch, -1)).astype(jnp.float32)  # s.view(batch, -1)
    in_features = x.shape[1]

    in_pad = padded_params[0][0].shape[0]
    state_dim = padded_params[-1][0].shape[1]
    assert in_features <= in_pad, "input features exceed padded first-layer K"

    # ---- batch tiling: pad batch only to a sublane multiple -----------------
    batch_pad = _round_up(batch, SUBLANE)
    if batch_pad != batch:
        x = jnp.pad(x, ((0, batch_pad - batch), (0, 0)))

    desired_tb = 512
    # >= 2 grid steps whenever the batch allows it (v7x dual-TC sharding).
    half = _round_up(pl.cdiv(batch_pad, 2), SUBLANE)
    # Cap the tile so per-tile activations stay comfortably inside VMEM even
    # when hidden_units is scaled up (resident weights live alongside them).
    widest = max(in_pad, max(w.shape[1] for w, _ in padded_params))
    act_budget = 8 * 1024 * 1024  # bytes for xpad + live activations per tile
    max_tb_vmem = max(SUBLANE, (act_budget // (4 * widest * 3)) // SUBLANE * SUBLANE)
    tb = max(SUBLANE, min(desired_tb, half, max_tb_vmem))
    grid = (pl.cdiv(batch_pad, tb),)

    num_linear = len(padded_params)
    kernel = make_mlp_kernel(num_linear, in_features)

    flat_params = []
    # x at natural width: last block dim equals the full array dim (OK per the
    # (8,128) rule); rows are a multiple of 8.
    in_specs = [pl.BlockSpec((tb, in_features), lambda i: (i, 0))]
    for w_p, b_p in padded_params:
        flat_params.extend([w_p, b_p])
        # Constant index_map: weights/biases stay VMEM-resident across steps.
        in_specs.append(pl.BlockSpec(w_p.shape, lambda i: (0, 0)))
        in_specs.append(pl.BlockSpec(b_p.shape, lambda i: (0, 0)))

    out = pl.pallas_call(
        kernel,
        out_shape=jax.ShapeDtypeStruct((batch_pad, state_dim), jnp.float32),
        grid=grid,
        in_specs=in_specs,
        out_specs=pl.BlockSpec((tb, state_dim), lambda i: (i, 0)),
        scratch_shapes=[pltpu.VMEM((tb, in_pad), jnp.float32)],
        compiler_params=pltpu.CompilerParams(
            dimension_semantics=("parallel",)),  # megacore-shardable batch axis
    )(x, *flat_params)

    # TODO(synk): wm_noise_level != 0.0 (additive Gaussian noise on logits) not
    # implemented; default module config uses 0.0 so forward matches exactly.
    return out[:batch, :]


def reference_forward(s, params):
    """Pure-JAX reference (same math as the PyTorch nn.Sequential)."""
    x = jnp.reshape(s, (s.shape[0], -1)).astype(jnp.float32)
    for i, (w, b) in enumerate(params):
        x = x @ w + b
        if i < len(params) - 1:
            x = jnp.maximum(x, 0.0)
    return x


if __name__ == "__main__":
    # Small, module-consistent shapes:
    #   state_shape = (4, 4) -> prod = 16, input features = 16 + 1 = 17
    #   layer_num = 2, hidden_units = 32, batch = 16 (gives a 2-step grid)
    state_shape = (4, 4)
    state_dim = int(state_shape[0] * state_shape[1])
    layer_num = 2
    hidden_units = 32
    batch = 16

    key = jax.random.PRNGKey(0)
    key, k_s = jax.random.split(key)
    # Input: flattened obs (16) concatenated with action (1) -> (batch, 17)
    s = jax.random.normal(k_s, (batch, state_dim + 1), jnp.float32)

    params = init_world_model_params(key, state_dim, layer_num, hidden_units)
    padded_params = prepare_world_model_params(params)  # padded ONCE

    out = world_model_forward(s, padded_params)
    out = jax.block_until_ready(out)

    ref = reference_forward(s, params)
    assert out.shape == (batch, state_dim)
    assert jnp.allclose(out, ref, atol=1e-5, rtol=1e-5), "Pallas output mismatch"

    print("KERNEL_OK")
</pallas_src>

<mosaic_0001>
module attributes {stable_mosaic.version = 11 : i64} {
  func.func @kernel(%arg0: i32, %arg1: memref<8x17xf32, #tpu.memory_space<vmem>>, %arg2: memref<128x128xf32, #tpu.memory_space<vmem>>, %arg3: memref<1x128xf32, #tpu.memory_space<vmem>>, %arg4: memref<128x128xf32, #tpu.memory_space<vmem>>, %arg5: memref<1x128xf32, #tpu.memory_space<vmem>>, %arg6: memref<128x16xf32, #tpu.memory_space<vmem>>, %arg7: memref<1x16xf32, #tpu.memory_space<vmem>>, %arg8: memref<8x16xf32, #tpu.memory_space<vmem>>, %arg9: memref<8x128xf32, #tpu.memory_space<vmem>>) attributes {dimension_semantics = [#tpu.dimension_semantics<parallel>], iteration_bounds = array<i64: 2>, scalar_prefetch = 0 : i64, scratch_operands = 1 : i64, tpu.core_type = #tpu.core_type<tc>, window_params = [{transform_indices = @transform_0, window_bounds = array<i64: 8, 17>}, {pipeline_mode = #tpu.pipeline_mode<synchronous>, transform_indices = @transform_1, window_bounds = array<i64: 128, 128>}, {pipeline_mode = #tpu.pipeline_mode<synchronous>, transform_indices = @transform_2, window_bounds = array<i64: 1, 128>}, {pipeline_mode = #tpu.pipeline_mode<synchronous>, transform_indices = @transform_3, window_bounds = array<i64: 128, 128>}, {pipeline_mode = #tpu.pipeline_mode<synchronous>, transform_indices = @transform_4, window_bounds = array<i64: 1, 128>}, {pipeline_mode = #tpu.pipeline_mode<synchronous>, transform_indices = @transform_5, window_bounds = array<i64: 128, 16>}, {pipeline_mode = #tpu.pipeline_mode<synchronous>, transform_indices = @transform_6, window_bounds = array<i64: 1, 16>}, {transform_indices = @transform_7, window_bounds = array<i64: 8, 16>}]} {
    %cst = arith.constant 0.000000e+00 : f32
    %0 = vector.broadcast %cst : f32 to vector<8x128xf32>
    %c0 = arith.constant 0 : index
    %c0_0 = arith.constant 0 : index
    %1 = vector.load %arg9[%c0, %c0_0] : memref<8x128xf32, #tpu.memory_space<vmem>>, vector<8x128xf32>
    tpu.vector_store %arg9[%c0, %c0_0], %0 {strides = array<i32>} : memref<8x128xf32, #tpu.memory_space<vmem>>, vector<8x128xf32>,
    %c0_1 = arith.constant 0 : index
    %c0_2 = arith.constant 0 : index
    %2 = vector.load %arg1[%c0_1, %c0_2] : memref<8x17xf32, #tpu.memory_space<vmem>>, vector<8x17xf32>
    %c0_3 = arith.constant 0 : index
    %c0_4 = arith.constant 0 : index
    %3 = vector.load %arg9[%c0_3, %c0_4] : memref<8x128xf32, #tpu.memory_space<vmem>>, vector<8x17xf32>
    tpu.vector_store %arg9[%c0_3, %c0_4], %2 {strides = array<i32>} : memref<8x128xf32, #tpu.memory_space<vmem>>, vector<8x17xf32>,
    %c0_5 = arith.constant 0 : index
    %c0_6 = arith.constant 0 : index
    %4 = vector.load %arg9[%c0_5, %c0_6] : memref<8x128xf32, #tpu.memory_space<vmem>>, vector<8x128xf32>
    %c0_7 = arith.constant 0 : index
    %c0_8 = arith.constant 0 : index
    %5 = vector.load %arg2[%c0_7, %c0_8] : memref<128x128xf32, #tpu.memory_space<vmem>>, vector<128x128xf32>
    %c0_9 = arith.constant 0 : index
    %c0_10 = arith.constant 0 : index
    %6 = vector.load %arg3[%c0_9, %c0_10] : memref<1x128xf32, #tpu.memory_space<vmem>>, vector<1x128xf32>
    %cst_11 = arith.constant dense<0.000000e+00> : vector<8x128xf32>
    %7 = tpu.matmul %4, %5, %cst_11 {dimension_numbers = #tpu.dot_dimension_numbers<[1], [0], [0], [1], [0, 0, 1, 1], [], []>} : vector<8x128xf32>, vector<128x128xf32>, vector<8x128xf32> -> vector<8x128xf32>
    %8 = vector.broadcast %6 : vector<1x128xf32> to vector<8x128xf32>
    %9 = arith.addf %7, %8 : vector<8x128xf32>
    %cst_12 = arith.constant 0.000000e+00 : f32
    %10 = vector.broadcast %cst_12 : f32 to vector<8x128xf32>
    %11 = arith.maximumf %9, %10 : vector<8x128xf32>
    %c0_13 = arith.constant 0 : index
    %c0_14 = arith.constant 0 : index
    %12 = vector.load %arg4[%c0_13, %c0_14] : memref<128x128xf32, #tpu.memory_space<vmem>>, vector<128x128xf32>
    %c0_15 = arith.constant 0 : index
    %c0_16 = arith.constant 0 : index
    %13 = vector.load %arg5[%c0_15, %c0_16] : memref<1x128xf32, #tpu.memory_space<vmem>>, vector<1x128xf32>
    %cst_17 = arith.constant dense<0.000000e+00> : vector<8x128xf32>
    %14 = tpu.matmul %11, %12, %cst_17 {dimension_numbers = #tpu.dot_dimension_numbers<[1], [0], [0], [1], [0, 0, 1, 1], [], []>} : vector<8x128xf32>, vector<128x128xf32>, vector<8x128xf32> -> vector<8x128xf32>
    %15 = vector.broadcast %13 : vector<1x128xf32> to vector<8x128xf32>
    %16 = arith.addf %14, %15 : vector<8x128xf32>
    %cst_18 = arith.constant 0.000000e+00 : f32
    %17 = vector.broadcast %cst_18 : f32 to vector<8x128xf32>
    %18 = arith.maximumf %16, %17 : vector<8x128xf32>
    %c0_19 = arith.constant 0 : index
    %c0_20 = arith.constant 0 : index
    %19 = vector.load %arg6[%c0_19, %c0_20] : memref<128x16xf32, #tpu.memory_space<vmem>>, vector<128x16xf32>
    %c0_21 = arith.constant 0 : index
    %c0_22 = arith.constant 0 : index
    %20 = vector.load %arg7[%c0_21, %c0_22] : memref<1x16xf32, #tpu.memory_space<vmem>>, vector<1x16xf32>
    %cst_23 = arith.constant dense<0.000000e+00> : vector<8x16xf32>
    %21 = tpu.matmul %18, %19, %cst_23 {dimension_numbers = #tpu.dot_dimension_numbers<[1], [0], [0], [1], [0, 0, 1, 1], [], []>} : vector<8x128xf32>, vector<128x16xf32>, vector<8x16xf32> -> vector<8x16xf32>
    %22 = vector.broadcast %20 : vector<1x16xf32> to vector<8x16xf32>
    %23 = arith.addf %21, %22 : vector<8x16xf32>
    %c0_24 = arith.constant 0 : index
    %c0_25 = arith.constant 0 : index
    %24 = vector.load %arg8[%c0_24, %c0_25] : memref<8x16xf32, #tpu.memory_space<vmem>>, vector<8x16xf32>
    tpu.vector_store %arg8[%c0_24, %c0_25], %23 {strides = array<i32>} : memref<8x16xf32, #tpu.memory_space<vmem>>, vector<8x16xf32>,
    return
  }
  func.func @transform_0(%arg0: i32) -> (i32, i32) {
    %c0_i32 = arith.constant 0 : i32
    %c0_i32_0 = arith.constant 0 : i32
    return %arg0, %c0_i32 : i32, i32
  }
  func.func @transform_1(%arg0: i32) -> (i32, i32) {
    %c0_i32 = arith.constant 0 : i32
    %c0_i32_0 = arith.constant 0 : i32
    %c0_i32_1 = arith.constant 0 : i32
    return %c0_i32, %c0_i32_0 : i32, i32
  }
  func.func @transform_2(%arg0: i32) -> (i32, i32) {
    %c0_i32 = arith.constant 0 : i32
    %c0_i32_0 = arith.constant 0 : i32
    %c0_i32_1 = arith.constant 0 : i32
    return %c0_i32, %c0_i32_0 : i32, i32
  }
  func.func @transform_3(%arg0: i32) -> (i32, i32) {
    %c0_i32 = arith.constant 0 : i32
    %c0_i32_0 = arith.constant 0 : i32
    %c0_i32_1 = arith.constant 0 : i32
    return %c0_i32, %c0_i32_0 : i32, i32
  }
  func.func @transform_4(%arg0: i32) -> (i32, i32) {
    %c0_i32 = arith.constant 0 : i32
    %c0_i32_0 = arith.constant 0 : i32
    %c0_i32_1 = arith.constant 0 : i32
    return %c0_i32, %c0_i32_0 : i32, i32
  }
  func.func @transform_5(%arg0: i32) -> (i32, i32) {
    %c0_i32 = arith.constant 0 : i32
    %c0_i32_0 = arith.constant 0 : i32
    %c0_i32_1 = arith.constant 0 : i32
    return %c0_i32, %c0_i32_0 : i32, i32
  }
  func.func @transform_6(%arg0: i32) -> (i32, i32) {
    %c0_i32 = arith.constant 0 : i32
    %c0_i32_0 = arith.constant 0 : i32
    %c0_i32_1 = arith.constant 0 : i32
    return %c0_i32, %c0_i32_0 : i32, i32
  }
  func.func @transform_7(%arg0: i32) -> (i32, i32) {
    %c0_i32 = arith.constant 0 : i32
    %c0_i32_0 = arith.constant 0 : i32
    return %arg0, %c0_i32 : i32, i32
  }
}

</mosaic_0001>

<llo_original>
// kernel: world_model_forward.1
$region0: #{world_model_forward.1}
  #allocation0 [shape = 'u32[]', space=smem, size = 0x4, offset = 0x4, fixed_abs, tag = 'smem constant byte address 0x4 - core index']
  #allocation1 [shape = 'u32[144,128]{1,0:T(1,128)}', space=vmem, size = 0x12000, scoped, tag = 'internal scratch']
  #allocation2 [shape = 'f32[8,128]{1,0:T(8,128)}', space=vmem, size = 0x1000, scoped, tag = 'scratch operand']
  %s0 = inlined_call_operand.vmem [shape: f32[16,17], index: 0, kind: input, shape index: {}]
  %s1 = inlined_call_operand.vmem [shape: f32[128,128], index: 1, kind: input, shape index: {}]
  %s2 = inlined_call_operand.vmem [shape: f32[1,128], index: 2, kind: input, shape index: {}]
  %s3 = inlined_call_operand.hbm [shape: f32[128,128], index: 3, kind: input, shape index: {}]
  %s4 = inlined_call_operand.vmem [shape: f32[1,128], index: 4, kind: input, shape index: {}]
  %s5 = inlined_call_operand.vmem [shape: f32[128,16], index: 5, kind: input, shape index: {}]
  %s6 = inlined_call_operand.vmem [shape: f32[1,16], index: 6, kind: input, shape index: {}]
  %s7 = inlined_call_operand.hbm [shape: f32[16,16], index: 7, kind: output, shape index: {}]
  %s8 = sld [smem:[#allocation0]]
  $region65: #{world_model_forward.1} parent=0
    _
  %s10 = ssub.s32 1, %s8
  %s11 = scalar_select 0, %s10, %s8
  $region1: #{world_model_forward.1} parent=0
    #allocation3 [shape = 'u8[65536]{0}', space=vmem, size = 0x10000, scoped, tag = 'input window, operand 3, single buffered']
    #allocation4 [shape = 's32[2]{0}', space=sflag, size = 0x8, scoped, tag = 'scoped memory for world_model_forward.1']
    #allocation5 [shape = 's32[2]{0}', space=sflag, size = 0x8, scoped, tag = 'scoped memory for world_model_forward.1']
    #allocation6 [shape = 'u8[8192]{0}', space=vmem, size = 0x2000, scoped, tag = 'output window, operand 0']
    %12 = vsyncpa [#allocation4], 0
    %13 = vsyncpa [#allocation5], 0
    %s14 = scalar_lea.sflag [#allocation5], 1
    %15 = vsyncpa %s14, 0
    loop: start=0, step=1, limit=4
    $region2: #{world_model_forward.1} parent=1 // loop_pre_header
      _
    $region3: #{world_model_forward.1} parent=1 // loop_header
      %s17 = sphi 0, %s21
      %p18 = scmp.ge.s32.totalorder %s17, 4
      %s27 = sphi 0, %s29
      %s30 = sphi 0, %s27
      %s31 = sphi 0, %s30
      %s47 = sphi 0, %s31
      %s51 = sphi 0, %s51
      %s53 = sphi 0, %s51
      %s54 = sphi 0, %s53
      %s68 = sphi 0, %s54
      %s72 = sphi 0, %s72
      %s74 = sphi 0, %s72
      %s75 = sphi 0, %s74
      %s89 = sphi 0, %s75
      %s93 = sphi 0, %s93
      %s95 = sphi 0, %s93
      %s96 = sphi 0, %s95
      %s110 = sphi 0, %s96
      %s114 = sphi 0, %s114
      %s116 = sphi 0, %s114
      %s117 = sphi 0, %s116
      %s131 = sphi 0, %s117
      %s135 = sphi 0, %s135
      %s137 = sphi 0, %s135
      %s138 = sphi 0, %s137
      %s152 = sphi 0, %s138
      %s156 = sphi 0, %s156
      %s158 = sphi 0, %s156
      %s159 = sphi 0, %s158
      %s173 = sphi 0, %s159
      %s179 = sphi 0, %s181
      %s182 = sphi 0, %s179
      %s183 = sphi 0, %s182
      %s199 = sphi 0, %s183
    $region4: #{world_model_forward.1} parent=1 // loop_header_branch
      %20 = sbr.rel (%p18) target = $region8
    $region5: #{world_model_forward.1} parent=1 // loop_body
      %s22 = ssub.s32 %s17, 1
      %s23 = ssub.s32 %s17, 2
      %s24 = sadd.s32 %s17, 1
      %s25 = ssub.s32 %s17, %s24
      %p26 = scmp.eq.s32.totalorder %s25, 0
      %s28 = sadd.s32 %s27, 1
      %s29 = scalar_select %p26, %s27, %s28
      %p32 = pneg %p26
      %p33 = scmp.eq.s32.totalorder %s17, 1
      %p34 = por %p32, %p33
      %p35 = scmp.ne.s32.totalorder %s27, %s30
      %p36 = scmp.eq.s32.totalorder %s17, 0
      %p37 = por %p35, %p36
      %p38 = scmp.ne.s32.totalorder %s27, %s30
      %p39 = scmp.eq.s32.totalorder %s22, 1
      %p40 = por %p38, %p39
      %p41 = scmp.ne.s32.totalorder %s30, %s31
      %p42 = scmp.eq.s32.totalorder %s22, 0
      %p43 = por %p41, %p42
      %p44 = scmp.ne.s32.totalorder %s30, %s31
      %p45 = scmp.eq.s32.totalorder %s23, 1
      %p46 = por %p44, %p45
      %p48 = scmp.ne.s32.totalorder %s31, %s47
      %p49 = scmp.eq.s32.totalorder %s23, 0
      %p50 = por %p48, %p49
      %s52 = sadd.s32 %s51, 1
      %p55 = scmp.eq.s32.totalorder %s17, 1
      %p56 = scmp.ne.s32.totalorder %s51, %s53
      %p57 = scmp.eq.s32.totalorder %s17, 0
      %p58 = por %p56, %p57
      %p59 = scmp.ne.s32.totalorder %s51, %s53
      %p60 = scmp.eq.s32.totalorder %s22, 1
      %p61 = por %p59, %p60
      %p62 = scmp.ne.s32.totalorder %s53, %s54
      %p63 = scmp.eq.s32.totalorder %s22, 0
      %p64 = por %p62, %p63
      %p65 = scmp.ne.s32.totalorder %s53, %s54
      %p66 = scmp.eq.s32.totalorder %s23, 1
      %p67 = por %p65, %p66
      %p69 = scmp.ne.s32.totalorder %s54, %s68
      %p70 = scmp.eq.s32.totalorder %s23, 0
      %p71 = por %p69, %p70
      %s73 = sadd.s32 %s72, 1
      %p76 = scmp.eq.s32.totalorder %s17, 1
      %p77 = scmp.ne.s32.totalorder %s72, %s74
      %p78 = scmp.eq.s32.totalorder %s17, 0
      %p79 = por %p77, %p78
      %p80 = scmp.ne.s32.totalorder %s72, %s74
      %p81 = scmp.eq.s32.totalorder %s22, 1
      %p82 = por %p80, %p81
      %p83 = scmp.ne.s32.totalorder %s74, %s75
      %p84 = scmp.eq.s32.totalorder %s22, 0
      %p85 = por %p83, %p84
      %p86 = scmp.ne.s32.totalorder %s74, %s75
      %p87 = scmp.eq.s32.totalorder %s23, 1
      %p88 = por %p86, %p87
      %p90 = scmp.ne.s32.totalorder %s75, %s89
      %p91 = scmp.eq.s32.totalorder %s23, 0
      %p92 = por %p90, %p91
      %s94 = sadd.s32 %s93, 1
      %p97 = scmp.eq.s32.totalorder %s17, 1
      %p98 = scmp.ne.s32.totalorder %s93, %s95
      %p99 = scmp.eq.s32.totalorder %s17, 0
      %p100 = por %p98, %p99
      %p101 = scmp.ne.s32.totalorder %s93, %s95
      %p102 = scmp.eq.s32.totalorder %s22, 1
      %p103 = por %p101, %p102
      %p104 = scmp.ne.s32.totalorder %s95, %s96
      %p105 = scmp.eq.s32.totalorder %s22, 0
      %p106 = por %p104, %p105
      %p107 = scmp.ne.s32.totalorder %s95, %s96
      %p108 = scmp.eq.s32.totalorder %s23, 1
      %p109 = por %p107, %p108
      %p111 = scmp.ne.s32.totalorder %s96, %s110
      %p112 = scmp.eq.s32.totalorder %s23, 0
      %p113 = por %p111, %p112
      %s115 = sadd.s32 %s114, 1
      %p118 = scmp.eq.s32.totalorder %s17, 1
      %p119 = scmp.ne.s32.totalorder %s114, %s116
      %p120 = scmp.eq.s32.totalorder %s17, 0
      %p121 = por %p119, %p120
      %p122 = scmp.ne.s32.totalorder %s114, %s116
      %p123 = scmp.eq.s32.totalorder %s22, 1
      %p124 = por %p122, %p123
      %p125 = scmp.ne.s32.totalorder %s116, %s117
      %p126 = scmp.eq.s32.totalorder %s22, 0
      %p127 = por %p125, %p126
      %p128 = scmp.ne.s32.totalorder %s116, %s117
      %p129 = scmp.eq.s32.totalorder %s23, 1
      %p130 = por %p128, %p129
      %p132 = scmp.ne.s32.totalorder %s117, %s131
      %p133 = scmp.eq.s32.totalorder %s23, 0
      %p134 = por %p132, %p133
      %s136 = sadd.s32 %s135, 1
      %p139 = scmp.eq.s32.totalorder %s17, 1
      %p140 = scmp.ne.s32.totalorder %s135, %s137
      %p141 = scmp.eq.s32.totalorder %s17, 0
      %p142 = por %p140, %p141
      %p143 = scmp.ne.s32.totalorder %s135, %s137
      %p144 = scmp.eq.s32.totalorder %s22, 1
      %p145 = por %p143, %p144
      %p146 = scmp.ne.s32.totalorder %s137, %s138
      %p147 = scmp.eq.s32.totalorder %s22, 0
      %p148 = por %p146, %p147
      %p149 = scmp.ne.s32.totalorder %s137, %s138
      %p150 = scmp.eq.s32.totalorder %s23, 1
      %p151 = por %p149, %p150
      %p153 = scmp.ne.s32.totalorder %s138, %s152
      %p154 = scmp.eq.s32.totalorder %s23, 0
      %p155 = por %p153, %p154
      %s157 = sadd.s32 %s156, 1
      %p160 = scmp.eq.s32.totalorder %s17, 1
      %p161 = scmp.ne.s32.totalorder %s156, %s158
      %p162 = scmp.eq.s32.totalorder %s17, 0
      %p163 = por %p161, %p162
      %p164 = scmp.ne.s32.totalorder %s156, %s158
      %p165 = scmp.eq.s32.totalorder %s22, 1
      %p166 = por %p164, %p165
      %p167 = scmp.ne.s32.totalorder %s158, %s159
      %p168 = scmp.eq.s32.totalorder %s22, 0
      %p169 = por %p167, %p168
      %p170 = scmp.ne.s32.totalorder %s158, %s159
      %p171 = scmp.eq.s32.totalorder %s23, 1
      %p172 = por %p170, %p171
      %p174 = scmp.ne.s32.totalorder %s159, %s173
      %p175 = scmp.eq.s32.totalorder %s23, 0
      %p176 = por %p174, %p175
      %s177 = ssub.s32 %s17, %s24
      %p178 = scmp.eq.s32.totalorder %s177, 0
      %s180 = sadd.s32 %s179, 1
      %s181 = scalar_select %p178, %s179, %s180
      %p184 = pneg %p178
      %p185 = scmp.eq.s32.totalorder %s17, 1
      %p186 = por %p184, %p185
      %p187 = scmp.ne.s32.totalorder %s179, %s182
      %p188 = scmp.eq.s32.totalorder %s17, 0
      %p189 = por %p187, %p188
      %p190 = scmp.ne.s32.totalorder %s179, %s182
      %p191 = scmp.eq.s32.totalorder %s22, 1
      %p192 = por %p190, %p191
      %p193 = scmp.ne.s32.totalorder %s182, %s183
      %p194 = scmp.eq.s32.totalorder %s22, 0
      %p195 = por %p193, %p194
      %p196 = scmp.ne.s32.totalorder %s182, %s183
      %p197 = scmp.eq.s32.totalorder %s23, 1
      %p198 = por %p196, %p197
      %p200 = scmp.ne.s32.totalorder %s183, %s199
      %p201 = scmp.eq.s32.totalorder %s23, 0
      %p202 = por %p200, %p201
      %p203 = scmp.le.s32.totalorder 1, %s17
      %p204 = scmp.lt.s32.totalorder %s17, 3
      %p205 = pnand %p203, %p204
      %p206 = pneg %p205
      // Predicated region
      $region9: #{world_model_forward.1} parent=5 // pred_check
        _
      $region10: #{world_model_forward.1} parent=5 // pred_check_branch
        %208 = sbr.rel (%p205) target = $region12
      $region11: #{world_model_forward.1} parent=5 // pred_region
        %s209 = ssub.s32 %s17, 1
        // Predicated region
        $region13: #{world_model_forward.1} parent=11 // pred_check
          %p210 = pneg %p64
        $region14: #{world_model_forward.1} parent=11 // pred_check_branch
          %212 = sbr.rel (%p210) target = $region16
        $region15: #{world_model_forward.1} parent=11 // pred_region
          _
        $region16: #{world_model_forward.1} parent=11 // pred_fallthru
          _
        // Predicated region
        $region17: #{world_model_forward.1} parent=11 // pred_check
          %p213 = pneg %p85
        $region18: #{world_model_forward.1} parent=11 // pred_check_branch
          %215 = sbr.rel (%p213) target = $region20
        $region19: #{world_model_forward.1} parent=11 // pred_region
          _
        $region20: #{world_model_forward.1} parent=11 // pred_fallthru
          _
        // Predicated region
        $region21: #{world_model_forward.1} parent=11 // pred_check
          %p216 = pneg %p106
        $region22: #{world_model_forward.1} parent=11 // pred_check_branch
          %218 = sbr.rel (%p216) target = $region24
        $region23: #{world_model_forward.1} parent=11 // pred_region
          %s220 = ssub.s32 2048, 2048
          %221 = vsyncadd [#allocation4], %s220
          %s222 = sshll.u32 [#allocation3], 4
          %s223 = int_to_ptr.vmem [resolvable:$true] %s222
          %228 = dma.hbm_to_vmem [thread:$0]  %s3, 2048, %s223, [#allocation4], 128, 128, 8
        $region24: #{world_model_forward.1} parent=11 // pred_fallthru
          _
        // Predicated region
        $region25: #{world_model_forward.1} parent=11 // pred_check
          %p229 = pneg %p127
        $region26: #{world_model_forward.1} parent=11 // pred_check_branch
          %231 = sbr.rel (%p229) target = $region28
        $region27: #{world_model_forward.1} parent=11 // pred_region
          _
        $region28: #{world_model_forward.1} parent=11 // pred_fallthru
          _
        // Predicated region
        $region29: #{world_model_forward.1} parent=11 // pred_check
          %p232 = pneg %p148
        $region30: #{world_model_forward.1} parent=11 // pred_check_branch
          %234 = sbr.rel (%p232) target = $region32
        $region31: #{world_model_forward.1} parent=11 // pred_region
          _
        $region32: #{world_model_forward.1} parent=11 // pred_fallthru
          _
        // Predicated region
        $region33: #{world_model_forward.1} parent=11 // pred_check
          %p235 = pneg %p169
        $region34: #{world_model_forward.1} parent=11 // pred_check_branch
          %237 = sbr.rel (%p235) target = $region36
        $region35: #{world_model_forward.1} parent=11 // pred_region
          _
        $region36: #{world_model_forward.1} parent=11 // pred_fallthru
          _
      $region12: #{world_model_forward.1} parent=5 // pred_fallthru
        _
      %p238 = scmp.lt.s32.totalorder %s17, 2
      // Predicated region
      $region37: #{world_model_forward.1} parent=5 // pred_check
        %p239 = pneg %p238
      $region38: #{world_model_forward.1} parent=5 // pred_check_branch
        %241 = sbr.rel (%p239) target = $region40
      $region39: #{world_model_forward.1} parent=5 // pred_region
        // Predicated region
        $region41: #{world_model_forward.1} parent=39 // pred_check
          %p242 = pneg %p37
        $region42: #{world_model_forward.1} parent=39 // pred_check_branch
          %244 = sbr.rel (%p242) target = $region44
        $region43: #{world_model_forward.1} parent=39 // pred_region
          %p245 = scmp.lt.s32.totalorder %s17, 1
          %s246 = scalar_select %p245, %s17, 1
          %s247 = smul.addr %s246, 8
          %s248 = scalar_lea.vmem %s0, %s247
        $region44: #{world_model_forward.1} parent=39 // pred_fallthru
          _
      $region40: #{world_model_forward.1} parent=5 // pred_fallthru
        _
      %p249 = scmp.le.s32.totalorder 1, %s17
      %p250 = scmp.lt.s32.totalorder %s17, 3
      %p251 = pnand %p249, %p250
      %p252 = pneg %p251
      // Predicated region
      $region45: #{world_model_forward.1} parent=5 // pred_check
        _
      $region46: #{world_model_forward.1} parent=5 // pred_check_branch
        %254 = sbr.rel (%p251) target = $region48
      $region47: #{world_model_forward.1} parent=5 // pred_region
        %s255 = ssub.s32 %s17, 1
        // Predicated region
        $region49: #{world_model_forward.1} parent=47 // pred_check
          %p256 = pneg %p106
        $region50: #{world_model_forward.1} parent=47 // pred_check_branch
          %258 = sbr.rel (%p256) target = $region52
        $region51: #{world_model_forward.1} parent=47 // pred_region
          %259 = dma.done [#allocation4], 2048
        $region52: #{world_model_forward.1} parent=47 // pred_fallthru
          _
        %p260 = scmp.lt.s32.totalorder %s22, 1
        %s261 = scalar_select %p260, %s22, 1
        %s262 = smul.addr %s261, 8
        %s263 = scalar_lea.vmem %s0, %s262
        %p264 = pneg %p43
        %p265 = pneg %p40
        %p266 = pneg %p64
        %p267 = pneg %p61
        %p268 = pneg %p85
        %p269 = pneg %p82
        %p270 = pneg %p106
        %p271 = pneg %p103
        %p272 = pneg %p127
        %p273 = pneg %p124
        %p274 = pneg %p148
        %p275 = pneg %p145
        %p276 = pneg %p169
        %p277 = pneg %p166
        %p278 = pneg %p195
        %p279 = pneg %p192
        %s280 = sand.u32 %s182, 1
        %s281 = scalar_lea.sflag [#allocation5], %s280
        %s282 = sand.u32 %s182, 1
        %s283 = smul.addr %s282, 8
        %s284 = scalar_lea.vmem [#allocation6], %s283
        %p285 = scmp.lt.s32.totalorder %s22, 1
        %s286 = scalar_select %p285, %s22, 1
        %s287 = smul.addr %s286, 8
        %s288 = scalar_lea.vmem %s0, %s287
        %289 = vst [vmem:[#allocation2] sm:$0xff] 0.0
        %v290 = vld [vmem:[%s288] sm:$0xff]
        %vm291 = vcmask 138240
        %292 = vst.msk [vmem:[#allocation2] sm:$0xff] %vm291, %v290
        %v293 = vld [vmem:[#allocation2] sm:$0xff]
        %v294 = vld [vmem:[%s1] sm:$0xff]
        %v295 = vld [vmem:[%s1 + $0x8] sm:$0xff]
        %v296 = vld [vmem:[%s1 + $0x10] sm:$0xff]
        %v297 = vld [vmem:[%s1 + $0x18] sm:$0xff]
        %v298 = vld [vmem:[%s1 + $0x20] sm:$0xff]
        %v299 = vld [vmem:[%s1 + $0x28] sm:$0xff]
        %v300 = vld [vmem:[%s1 + $0x30] sm:$0xff]
        %v301 = vld [vmem:[%s1 + $0x38] sm:$0xff]
        %v302 = vld [vmem:[%s1 + $0x40] sm:$0xff]
        %v303 = vld [vmem:[%s1 + $0x48] sm:$0xff]
        %v304 = vld [vmem:[%s1 + $0x50] sm:$0xff]
        %v305 = vld [vmem:[%s1 + $0x58] sm:$0xff]
        %v306 = vld [vmem:[%s1 + $0x60] sm:$0xff]
        %v307 = vld [vmem:[%s1 + $0x68] sm:$0xff]
        %v308 = vld [vmem:[%s1 + $0x70] sm:$0xff]
        %v309 = vld [vmem:[%s1 + $0x78] sm:$0xff]
        %v310 = vld [vmem:[%s2] sm:$0x1]
        %v312 = vlaneseq
        %v313 = vshrl.u32 %v312, 7
        %v314 = vsub.s32 0, %v313
        %v315 = vrot.slane %v310, %v314
        %317 = vmatprep.subr.mxu0 0.0
        %318 = vmatpush1.msra.mxu0 %v294
        %319 = vmatprep.subr.mxu0 0.0
        %320 = vmatpush1.msra.mxu0 %v295
        %321 = vmatprep.subr.mxu0 0.0
        %322 = vmatpush1.msra.mxu0 %v296
        %323 = vmatprep.subr.mxu0 0.0
        %324 = vmatpush1.msra.mxu0 %v297
        %325 = vmatprep.subr.mxu0 0.0
        %326 = vmatpush1.msra.mxu0 %v298
        %327 = vmatprep.subr.mxu0 0.0
        %328 = vmatpush1.msra.mxu0 %v299
        %329 = vmatprep.subr.mxu0 0.0
        %330 = vmatpush1.msra.mxu0 %v300
        %331 = vmatprep.subr.mxu0 0.0
        %332 = vmatpush1.msra.mxu0 %v301
        %333 = vmatprep.subr.mxu0 0.0
        %334 = vmatpush1.msra.mxu0 %v302
        %335 = vmatprep.subr.mxu0 0.0
        %336 = vmatpush1.msra.mxu0 %v303
        %337 = vmatprep.subr.mxu0 0.0
        %338 = vmatpush1.msra.mxu0 %v304
        %339 = vmatprep.subr.mxu0 0.0
        %340 = vmatpush1.msra.mxu0 %v305
        %341 = vmatprep.subr.mxu0 0.0
        %342 = vmatpush1.msra.mxu0 %v306
        %343 = vmatprep.subr.mxu0 0.0
        %344 = vmatpush1.msra.mxu0 %v307
        %345 = vmatprep.subr.mxu0 0.0
        %346 = vmatpush1.msra.mxu0 %v308
        %347 = vmatprep.subr.mxu0 0.0
        %348 = vmatpush1.msra.mxu0 %v309
        %349 = vmatprep.subr.mxu0 0.0
        %350 = vmatpush1.msra.mxu0 0.0
        %351 = vmatprep.subr.mxu0 0.0
        %352 = vmatpush1.msra.mxu0 0.0
        %353 = vmatprep.subr.mxu0 0.0
        %354 = vmatpush1.msra.mxu0 0.0
        %355 = vmatprep.subr.mxu0 0.0
        %356 = vmatpush1.msra.mxu0 0.0
        %357 = vmatprep.subr.mxu0 0.0
        %358 = vmatpush1.msra.mxu0 0.0
        %359 = vmatprep.subr.mxu0 0.0
        %360 = vmatpush1.msra.mxu0 0.0
        %361 = vmatprep.subr.mxu0 0.0
        %362 = vmatpush1.msra.mxu0 0.0
        %363 = vmatprep.subr.mxu0 0.0
        %364 = vmatpush1.msra.mxu0 0.0
        %365 = vmatprep.subr.mxu0 0.0
        %366 = vmatpush1.msra.mxu0 0.0
        %367 = vmatprep.subr.mxu0 0.0
        %368 = vmatpush1.msra.mxu0 0.0
        %369 = vmatprep.subr.mxu0 0.0
        %370 = vmatpush1.msra.mxu0 0.0
        %371 = vmatprep.subr.mxu0 0.0
        %372 = vmatpush1.msra.mxu0 0.0
        %373 = vmatprep.subr.mxu0 0.0
        %374 = vmatpush1.msra.mxu0 0.0
        %375 = vmatprep.subr.mxu0 0.0
        %376 = vmatpush1.msra.mxu0 0.0
        %377 = vmatprep.subr.mxu0 0.0
        %378 = vmatpush1.msra.mxu0 0.0
        %379 = vmatprep.subr.mxu0 0.0
        %380 = vmatpush1.msra.mxu0 0.0
        %381 = vmatprep.mubr.f32.mxu0 0.0
        %382 = vmatmul.mubr.f32.gmra.mrb[0].mxu0 %v293
        %v383 = vpop.f32.mrb[0].mxu0
        %v384 = vadd.f32 %v315, %v383
        %v385 = vpop.f32.mrb[0].mxu0
        %386 = vdwg.mxu0
        %v387 = vmax.f32 %v384, 0.0
        %v388 = vld [vmem:[#allocation3] sm:$0xff]
        %v389 = vld [vmem:[#allocation3 + $0x8] sm:$0xff]
        %v390 = vld [vmem:[#allocation3 + $0x10] sm:$0xff]
        %v391 = vld [vmem:[#allocation3 + $0x18] sm:$0xff]
        %v392 = vld [vmem:[#allocation3 + $0x20] sm:$0xff]
        %v393 = vld [vmem:[#allocation3 + $0x28] sm:$0xff]
        %v394 = vld [vmem:[#allocation3 + $0x30] sm:$0xff]
        %v395 = vld [vmem:[#allocation3 + $0x38] sm:$0xff]
        %v396 = vld [vmem:[#allocation3 + $0x40] sm:$0xff]
        %v397 = vld [vmem:[#allocation3 + $0x48] sm:$0xff]
        %v398 = vld [vmem:[#allocation3 + $0x50] sm:$0xff]
        %v399 = vld [vmem:[#allocation3 + $0x58] sm:$0xff]
        %v400 = vld [vmem:[#allocation3 + $0x60] sm:$0xff]
        %v401 = vld [vmem:[#allocation3 + $0x68] sm:$0xff]
        %v402 = vld [vmem:[#allocation3 + $0x70] sm:$0xff]
        %v403 = vld [vmem:[#allocation3 + $0x78] sm:$0xff]
        %v404 = vld [vmem:[%s4] sm:$0x1]
        %v406 = vlaneseq
        %v407 = vshrl.u32 %v406, 7
        %v408 = vsub.s32 0, %v407
        %v409 = vrot.slane %v404, %v408
        %411 = vmatprep.subr.mxu0 0.0
        %412 = vmatpush1.msra.mxu0 %v388
        %413 = vmatprep.subr.mxu0 0.0
        %414 = vmatpush1.msra.mxu0 %v389
        %415 = vmatprep.subr.mxu0 0.0
        %416 = vmatpush1.msra.mxu0 %v390
        %417 = vmatprep.subr.mxu0 0.0
        %418 = vmatpush1.msra.mxu0 %v391
        %419 = vmatprep.subr.mxu0 0.0
        %420 = vmatpush1.msra.mxu0 %v392
        %421 = vmatprep.subr.mxu0 0.0
        %422 = vmatpush1.msra.mxu0 %v393
        %423 = vmatprep.subr.mxu0 0.0
        %424 = vmatpush1.msra.mxu0 %v394
        %425 = vmatprep.subr.mxu0 0.0
        %426 = vmatpush1.msra.mxu0 %v395
        %427 = vmatprep.subr.mxu0 0.0
        %428 = vmatpush1.msra.mxu0 %v396
        %429 = vmatprep.subr.mxu0 0.0
        %430 = vmatpush1.msra.mxu0 %v397
        %431 = vmatprep.subr.mxu0 0.0
        %432 = vmatpush1.msra.mxu0 %v398
        %433 = vmatprep.subr.mxu0 0.0
        %434 = vmatpush1.msra.mxu0 %v399
        %435 = vmatprep.subr.mxu0 0.0
        %436 = vmatpush1.msra.mxu0 %v400
        %437 = vmatprep.subr.mxu0 0.0
        %438 = vmatpush1.msra.mxu0 %v401
        %439 = vmatprep.subr.mxu0 0.0
        %440 = vmatpush1.msra.mxu0 %v402
        %441 = vmatprep.subr.mxu0 0.0
        %442 = vmatpush1.msra.mxu0 %v403
        %443 = vmatprep.subr.mxu0 0.0
        %444 = vmatpush1.msra.mxu0 0.0
        %445 = vmatprep.subr.mxu0 0.0
        %446 = vmatpush1.msra.mxu0 0.0
        %447 = vmatprep.subr.mxu0 0.0
        %448 = vmatpush1.msra.mxu0 0.0
        %449 = vmatprep.subr.mxu0 0.0
        %450 = vmatpush1.msra.mxu0 0.0
        %451 = vmatprep.subr.mxu0 0.0
        %452 = vmatpush1.msra.mxu0 0.0
        %453 = vmatprep.subr.mxu0 0.0
        %454 = vmatpush1.msra.mxu0 0.0
        %455 = vmatprep.subr.mxu0 0.0
        %456 = vmatpush1.msra.mxu0 0.0
        %457 = vmatprep.subr.mxu0 0.0
        %458 = vmatpush1.msra.mxu0 0.0
        %459 = vmatprep.subr.mxu0 0.0
        %460 = vmatpush1.msra.mxu0 0.0
        %461 = vmatprep.subr.mxu0 0.0
        %462 = vmatpush1.msra.mxu0 0.0
        %463 = vmatprep.subr.mxu0 0.0
        %464 = vmatpush1.msra.mxu0 0.0
        %465 = vmatprep.subr.mxu0 0.0
        %466 = vmatpush1.msra.mxu0 0.0
        %467 = vmatprep.subr.mxu0 0.0
        %468 = vmatpush1.msra.mxu0 0.0
        %469 = vmatprep.subr.mxu0 0.0
        %470 = vmatpush1.msra.mxu0 0.0
        %471 = vmatprep.subr.mxu0 0.0
        %472 = vmatpush1.msra.mxu0 0.0
        %473 = vmatprep.subr.mxu0 0.0
        %474 = vmatpush1.msra.mxu0 0.0
        %475 = vmatprep.mubr.f32.mxu0 0.0
        %476 = vmatmul.mubr.f32.gmra.mrb[0].mxu0 %v387
        %v477 = vpop.f32.mrb[0].mxu0
        %v478 = vadd.f32 %v409, %v477
        %v479 = vpop.f32.mrb[0].mxu0
        %480 = vdwg.mxu0
        %v481 = vmax.f32 %v478, 0.0
        %v482 = vld [vmem:[%s5] sm:$0xff]
        %v483 = vld [vmem:[%s5 + $0x8] sm:$0xff]
        %v484 = vld [vmem:[%s5 + $0x10] sm:$0xff]
        %v485 = vld [vmem:[%s5 + $0x18] sm:$0xff]
        %v486 = vld [vmem:[%s5 + $0x20] sm:$0xff]
        %v487 = vld [vmem:[%s5 + $0x28] sm:$0xff]
        %v488 = vld [vmem:[%s5 + $0x30] sm:$0xff]
        %v489 = vld [vmem:[%s5 + $0x38] sm:$0xff]
        %v490 = vld [vmem:[%s5 + $0x40] sm:$0xff]
        %v491 = vld [vmem:[%s5 + $0x48] sm:$0xff]
        %v492 = vld [vmem:[%s5 + $0x50] sm:$0xff]
        %v493 = vld [vmem:[%s5 + $0x58] sm:$0xff]
        %v494 = vld [vmem:[%s5 + $0x60] sm:$0xff]
        %v495 = vld [vmem:[%s5 + $0x68] sm:$0xff]
        %v496 = vld [vmem:[%s5 + $0x70] sm:$0xff]
        %v497 = vld [vmem:[%s5 + $0x78] sm:$0xff]
        %v498 = vld [vmem:[%s6] sm:$0x1]
        %v500 = vlaneseq
        %v501 = vshrl.u32 %v500, 7
        %v502 = vsub.s32 0, %v501
        %v503 = vrot.slane %v498, %v502
        %505 = vmatprep.subr.mxu0 0.0
        %506 = vmatpush1.msra.mxu0 %v482
        %507 = vmatprep.subr.mxu0 0.0
        %508 = vmatpush1.msra.mxu0 %v483
        %509 = vmatprep.subr.mxu0 0.0
        %510 = vmatpush1.msra.mxu0 %v484
        %511 = vmatprep.subr.mxu0 0.0
        %512 = vmatpush1.msra.mxu0 %v485
        %513 = vmatprep.subr.mxu0 0.0
        %514 = vmatpush1.msra.mxu0 %v486
        %515 = vmatprep.subr.mxu0 0.0
        %516 = vmatpush1.msra.mxu0 %v487
        %517 = vmatprep.subr.mxu0 0.0
        %518 = vmatpush1.msra.mxu0 %v488
        %519 = vmatprep.subr.mxu0 0.0
        %520 = vmatpush1.msra.mxu0 %v489
        %521 = vmatprep.subr.mxu0 0.0
        %522 = vmatpush1.msra.mxu0 %v490
        %523 = vmatprep.subr.mxu0 0.0
        %524 = vmatpush1.msra.mxu0 %v491
        %525 = vmatprep.subr.mxu0 0.0
        %526 = vmatpush1.msra.mxu0 %v492
        %527 = vmatprep.subr.mxu0 0.0
        %528 = vmatpush1.msra.mxu0 %v493
        %529 = vmatprep.subr.mxu0 0.0
        %530 = vmatpush1.msra.mxu0 %v494
        %531 = vmatprep.subr.mxu0 0.0
        %532 = vmatpush1.msra.mxu0 %v495
        %533 = vmatprep.subr.mxu0 0.0
        %534 = vmatpush1.msra.mxu0 %v496
        %535 = vmatprep.subr.mxu0 0.0
        %536 = vmatpush1.msra.mxu0 %v497
        %537 = vmatprep.subr.mxu0 0.0
        %538 = vmatpush1.msra.mxu0 0.0
        %539 = vmatprep.subr.mxu0 0.0
        %540 = vmatpush1.msra.mxu0 0.0
        %541 = vmatprep.subr.mxu0 0.0
        %542 = vmatpush1.msra.mxu0 0.0
        %543 = vmatprep.subr.mxu0 0.0
        %544 = vmatpush1.msra.mxu0 0.0
        %545 = vmatprep.subr.mxu0 0.0
        %546 = vmatpush1.msra.mxu0 0.0
        %547 = vmatprep.subr.mxu0 0.0
        %548 = vmatpush1.msra.mxu0 0.0
        %549 = vmatprep.subr.mxu0 0.0
        %550 = vmatpush1.msra.mxu0 0.0
        %551 = vmatprep.subr.mxu0 0.0
        %552 = vmatpush1.msra.mxu0 0.0
        %553 = vmatprep.subr.mxu0 0.0
        %554 = vmatpush1.msra.mxu0 0.0
        %555 = vmatprep.subr.mxu0 0.0
        %556 = vmatpush1.msra.mxu0 0.0
        %557 = vmatprep.subr.mxu0 0.0
        %558 = vmatpush1.msra.mxu0 0.0
        %559 = vmatprep.subr.mxu0 0.0
        %560 = vmatpush1.msra.mxu0 0.0
        %561 = vmatprep.subr.mxu0 0.0
        %562 = vmatpush1.msra.mxu0 0.0
        %563 = vmatprep.subr.mxu0 0.0
        %564 = vmatpush1.msra.mxu0 0.0
        %565 = vmatprep.subr.mxu0 0.0
        %566 = vmatpush1.msra.mxu0 0.0
        %567 = vmatprep.subr.mxu0 0.0
        %568 = vmatpush1.msra.mxu0 0.0
        %569 = vmatprep.mubr.f32.mxu0 0.0
        %570 = vmatmul.mubr.f32.gmra.mrb[0].mxu0 %v481
        %v571 = vpop.f32.mrb[0].mxu0
        %v572 = vadd.f32 %v503, %v571
        %v573 = vpop.f32.mrb[0].mxu0
        %574 = vdwg.mxu0
        %vm575 = vcmask 130048
        %576 = vst.msk [vmem:[%s284] sm:$0xff] %vm575, %v572
        %s577 = sand.u32 %s182, 1
        %s578 = scalar_lea.sflag [#allocation5], %s577
        %s579 = sand.u32 %s182, 1
        %s580 = smul.addr %s579, 8
        %s581 = scalar_lea.vmem [#allocation6], %s580
        // Predicated region
        $region53: #{world_model_forward.1} parent=47 // pred_check
          %p582 = pneg %p192
        $region54: #{world_model_forward.1} parent=47 // pred_check_branch
          %584 = sbr.rel (%p582) target = $region56
        $region55: #{world_model_forward.1} parent=47 // pred_region
          %s586 = ssub.s32 128, 128
          %587 = vsyncadd %s578, %s586
          %s588 = smul.addr %s22, 128
          %s589 = scalar_lea.hbm %s7, %s588
          %s591 = sshll.u32 %s581, 4
          %s592 = int_to_ptr.vmem [resolvable:$true] %s591
          %594 = dma.vmem_to_hbm [thread:$0]  %s592, 128, %s589, %s578
        $region56: #{world_model_forward.1} parent=47 // pred_fallthru
          _
      $region48: #{world_model_forward.1} parent=5 // pred_fallthru
        _
      %p595 = scmp.le.s32.totalorder 2, %s17
      // Predicated region
      $region57: #{world_model_forward.1} parent=5 // pred_check
        %p596 = pneg %p595
      $region58: #{world_model_forward.1} parent=5 // pred_check_branch
        %598 = sbr.rel (%p596) target = $region60
      $region59: #{world_model_forward.1} parent=5 // pred_region
        %s599 = ssub.s32 %s17, 2
        // Predicated region
        $region61: #{world_model_forward.1} parent=59 // pred_check
          %p600 = pneg %p198
        $region62: #{world_model_forward.1} parent=59 // pred_check_branch
          %602 = sbr.rel (%p600) target = $region64
        $region63: #{world_model_forward.1} parent=59 // pred_region
          %s603 = sand.u32 %s183, 1
          %s604 = scalar_lea.sflag [#allocation5], %s603
          %s605 = sand.u32 %s183, 1
          %s606 = smul.addr %s605, 8
          %s607 = scalar_lea.vmem [#allocation6], %s606
          %608 = dma.done %s604, 128
        $region64: #{world_model_forward.1} parent=59 // pred_fallthru
          _
      $region60: #{world_model_forward.1} parent=5 // pred_fallthru
        _
    $region6: #{world_model_forward.1} parent=1 // loop_footer
      %s21 = sadd.s32 1, %s17
    $region7: #{world_model_forward.1} parent=1 // loop_footer_branch
      %16 = sbr.rel target = $region3
    $region8: #{world_model_forward.1} parent=1 // loop_exit
      _
    %609 = vsyncpa [#allocation4], 1
    %s610 = scalar_lea.sflag [#allocation4], 1
    %611 = vsyncpa %s610, 1
    %612 = vsyncpa [#allocation5], 1
    %s613 = scalar_lea.sflag [#allocation5], 1
    %614 = vsyncpa %s613, 1

</llo_original>
